<compile_context>
chip_gen: v7x
topology: tpu7x:2x2x1
jax: 0.10.0
libtpu: 0.0.40
codegen_flags: <defaults>
</compile_context>

<pallas_src>
import functools

import jax
import jax.numpy as jnp
from jax.experimental import pallas as pl
from jax.experimental.pallas import tpu as pltpu

NEG_SLOPE = 0.01                      # nn.LeakyReLU default
VMEM_LIMIT_BYTES = 48 * 1024 * 1024   # safe on v7x (64 MiB), roomy on v5e/v6e


def _leaky_relu(x):
    # max(x, 0.01*x) == leaky_relu(x) for 0 < slope < 1  (2 VALU ops vs 3).
    return jnp.maximum(x, NEG_SLOPE * x)


def _pick_batch_tile(B, cap=128):
    """Full batch if small; else the largest multiple-of-8 divisor <= cap so the
    leading grid axis can be sharded across TensorCores (v7x megacore)."""
    if B <= cap:
        return B
    for tb in range(cap, 7, -1):
        if B % tb == 0 and tb % 8 == 0:
            return tb
    return B


def _pick_seq_tile(S, TB, D, H1p, H2, budget_bytes):
    """Largest sequence tile whose VMEM working set fits `budget_bytes`.

    Per (batch-row, seq-pos) bytes live in VMEM:
      f32 x block, double-buffered by the pipeline : 2 * D * 4
      h1 f32 + h1 bf16 repack + h2 f32             : H1p*4 + H1p*2 + H2*4
    Prefers a multiple-of-8 divisor of S (keeps in-kernel reshapes free).
    """
    per_row = 2 * D * 4 + H1p * 4 + H1p * 2 + H2 * 4
    max_rows = max(8, budget_bytes // max(1, TB * per_row))
    cap = max(8, min(2048, (max_rows // 8) * 8))
    if S <= cap:
        return S
    best = None
    for ts in range(cap, 0, -1):
        if S % ts == 0:
            if ts % 8 == 0:
                return ts          # largest multiple-of-8 divisor <= cap
            if best is None:
                best = ts          # largest divisor of any kind <= cap
    return best if best is not None else S


def _classifier_kernel(x_ref, w1_ref, b1_ref, w2_ref, b2_ref, w3_ref, b3_ref,
                       o_ref, acc_ref, *, inv_seq):
    s = pl.program_id(1)

    @pl.when(s == 0)
    def _init():
        acc_ref[...] = jnp.zeros_like(acc_ref)

    TB, TS, D = x_ref.shape
    # In-kernel bf16 cast: x stays f32 in HBM (no extra wrapper-side HBM pass).
    # Collapse leading dims only (last dim stays the lane dim) -> (TB*TS, D).
    x = x_ref[...].astype(jnp.bfloat16).reshape(TB * TS, D)

    # Linear(2H, 300 zero-padded to 384) + LeakyReLU   (dropout = identity)
    h1 = jnp.dot(x, w1_ref[...], preferred_element_type=jnp.float32) + b1_ref[...]
    h1 = _leaky_relu(h1)

    # Linear(384 padded, 128) + LeakyReLU
    h2 = jnp.dot(h1.astype(jnp.bfloat16), w2_ref[...],
                 preferred_element_type=jnp.float32) + b2_ref[...]
    h2 = _leaky_relu(h2)

    # Accumulate per-batch-row sum of h2 over this tile's sequence positions.
    acc_ref[...] += jnp.sum(h2.reshape(TB, TS, -1), axis=1)

    @pl.when(s == pl.num_programs(1) - 1)
    def _finalize():
        mean_h2 = acc_ref[...] * inv_seq                     # (TB, 128) f32
        logits = jnp.dot(mean_h2, w3_ref[...],
                         preferred_element_type=jnp.float32) + b3_ref[...]
        o_ref[...] = logits.astype(o_ref.dtype)


def prepare_params(params):
    """One-time weight prep (hoisted out of the forward call).

    Pads the 300-wide hidden layer to 384 (lane-dense h1 / w2-K) and casts the
    MXU-bound weights to bf16. Exact: leaky_relu(0) = 0 and padded w2 rows are 0.
    """
    w1, b1, w2, b2, w3, b3 = params
    H1 = w1.shape[1]
    H1p = ((H1 + 127) // 128) * 128
    pad = H1p - H1
    w1p = jnp.pad(w1, ((0, 0), (0, pad))).astype(jnp.bfloat16)
    b1p = jnp.pad(b1.reshape(1, -1), ((0, 0), (0, pad))).astype(jnp.float32)
    w2p = jnp.pad(w2, ((0, pad), (0, 0))).astype(jnp.bfloat16)
    b2f = b2.reshape(1, -1).astype(jnp.float32)
    w3f = w3.astype(jnp.float32)
    b3f = b3.reshape(1, -1).astype(jnp.float32)
    return w1p, b1p, w2p, b2f, w3f, b3f


def classifier_forward(x, prepared, *, vmem_limit_bytes=VMEM_LIMIT_BYTES):
    """x: (B, S, 2*hidden) float32, prepared = prepare_params(params)
    -> (B, num_classes) float32 (eval mode)."""
    w1p, b1p, w2p, b2f, w3f, b3f = prepared
    B, S, D = x.shape
    H1p = w1p.shape[1]          # 384 (padded 300)
    H2 = w2p.shape[1]           # 128
    C = w3f.shape[1]

    # Resident (single-buffered) weight/bias bytes in VMEM.
    weight_bytes = int(w1p.size * 2 + b1p.size * 4 + w2p.size * 2
                       + b2f.size * 4 + w3f.size * 4 + b3f.size * 4)

    TB = _pick_batch_tile(B)
    tile_budget = max(1 << 20, vmem_limit_bytes // 2 - weight_bytes)
    TS = _pick_seq_tile(S, TB, D, H1p, H2, tile_budget)
    grid = (B // TB, S // TS)

    kernel = functools.partial(_classifier_kernel, inv_seq=1.0 / S)

    def _resident(arr):
        nd = arr.ndim
        # Constant index_map -> block never changes; single buffer saves VMEM.
        return pl.BlockSpec(arr.shape, lambda b, s: (0,) * nd,
                            pipeline_mode=pl.Buffered(1))

    cost = pl.CostEstimate(
        flops=2 * B * S * (D * H1p + H1p * H2) + 2 * B * H2 * C,
        transcendentals=0,
        bytes_accessed=B * S * D * x.dtype.itemsize + weight_bytes + B * C * 4,
    )

    return pl.pallas_call(
        kernel,
        out_shape=jax.ShapeDtypeStruct((B, C), jnp.float32),
        grid_spec=pltpu.PrefetchScalarGridSpec(
            num_scalar_prefetch=0,
            grid=grid,
            in_specs=[
                pl.BlockSpec((TB, TS, D), lambda b, s: (b, s, 0)),  # x tiles (pipelined)
                _resident(w1p), _resident(b1p),
                _resident(w2p), _resident(b2f),
                _resident(w3f), _resident(b3f),
            ],
            out_specs=pl.BlockSpec((TB, C), lambda b, s: (b, 0)),   # resident per batch tile
            scratch_shapes=[pltpu.VMEM((TB, H2), jnp.float32)],     # mean accumulator
        ),
        compiler_params=pltpu.CompilerParams(
            dimension_semantics=("parallel", "arbitrary"),  # batch parallel, seq reduction
            vmem_limit_bytes=vmem_limit_bytes,
        ),
        cost_estimate=cost,
    )(x, w1p, b1p, w2p, b2f, w3f, b3f)


def init_params(key, hidden_size, num_classes=3):
    """Deterministic PyTorch-style (kaiming-uniform-ish) init.

    Weights are stored transposed relative to torch: (in_features, out_features).
    Biases are stored as (1, out_features) for TPU-friendly 2D layout.
    """
    dims = [(2 * hidden_size, 300), (300, 128), (128, num_classes)]
    params = []
    for i, (fan_in, fan_out) in enumerate(dims):
        kw, kb = jax.random.split(jax.random.fold_in(key, i))
        bound = 1.0 / jnp.sqrt(jnp.float32(fan_in))
        w = jax.random.uniform(kw, (fan_in, fan_out), jnp.float32, -bound, bound)
        b = jax.random.uniform(kb, (1, fan_out), jnp.float32, -bound, bound)
        params += [w, b]
    return tuple(params)


def reference_forward(x, params):
    """Plain-JAX f32 reference (eval mode, dropout = identity)."""
    w1, b1, w2, b2, w3, b3 = params
    h1 = _leaky_relu(jnp.einsum("bsd,dh->bsh", x, w1) + b1)
    h2 = _leaky_relu(jnp.einsum("bsd,dh->bsh", h1, w2) + b2)
    logits = jnp.einsum("bsd,dc->bsc", h2, w3) + b3
    return jnp.mean(logits, axis=1)


if __name__ == "__main__":
    key = jax.random.PRNGKey(0)
    batch, seq, hidden, num_classes = 2, 8, 32, 3

    kx, kp = jax.random.split(key)
    x = jax.random.normal(kx, (batch, seq, 2 * hidden), jnp.float32)
    params = init_params(kp, hidden, num_classes)
    prepared = prepare_params(params)       # one-time weight prep (hoisted)

    out = classifier_forward(x, prepared)
    out = jax.block_until_ready(out)

    ref = reference_forward(x, params)
    assert out.shape == (batch, num_classes), out.shape
    # bf16 MXU inputs with f32 accumulation -> loosen tolerance vs f32 reference.
    assert jnp.allclose(out, ref, atol=2e-2, rtol=2e-2), (out, ref)

    print("KERNEL_OK")
</pallas_src>

<mosaic_0001>
module attributes {stable_mosaic.version = 11 : i64} {
  func.func @_classifier_kernel(%arg0: i32, %arg1: i32, %arg2: memref<2x8x64xf32, #tpu.memory_space<vmem>>, %arg3: memref<64x384xbf16, #tpu.memory_space<vmem>>, %arg4: memref<1x384xf32, #tpu.memory_space<vmem>>, %arg5: memref<384x128xbf16, #tpu.memory_space<vmem>>, %arg6: memref<1x128xf32, #tpu.memory_space<vmem>>, %arg7: memref<128x3xf32, #tpu.memory_space<vmem>>, %arg8: memref<1x3xf32, #tpu.memory_space<vmem>>, %arg9: memref<2x3xf32, #tpu.memory_space<vmem>>, %arg10: memref<2x128xf32, #tpu.memory_space<vmem>>) attributes {dimension_semantics = [#tpu.dimension_semantics<parallel>, #tpu.dimension_semantics<arbitrary>], iteration_bounds = array<i64: 1, 1>, scalar_prefetch = 0 : i64, scratch_operands = 1 : i64, tpu.core_type = #tpu.core_type<tc>, window_params = [{transform_indices = @transform_0, window_bounds = array<i64: 2, 8, 64>}, {pipeline_mode = #tpu.pipeline_mode<synchronous>, transform_indices = @transform_1, window_bounds = array<i64: 64, 384>}, {pipeline_mode = #tpu.pipeline_mode<synchronous>, transform_indices = @transform_2, window_bounds = array<i64: 1, 384>}, {pipeline_mode = #tpu.pipeline_mode<synchronous>, transform_indices = @transform_3, window_bounds = array<i64: 384, 128>}, {pipeline_mode = #tpu.pipeline_mode<synchronous>, transform_indices = @transform_4, window_bounds = array<i64: 1, 128>}, {pipeline_mode = #tpu.pipeline_mode<synchronous>, transform_indices = @transform_5, window_bounds = array<i64: 128, 3>}, {pipeline_mode = #tpu.pipeline_mode<synchronous>, transform_indices = @transform_6, window_bounds = array<i64: 1, 3>}, {transform_indices = @transform_7, window_bounds = array<i64: 2, 3>}]} {
    %c0_i32 = arith.constant 0 : i32
    %0 = arith.cmpi eq, %arg1, %c0_i32 : i32
    %1 = arith.extui %0 : i1 to i32
    %c0_i32_0 = arith.constant 0 : i32
    %2 = arith.cmpi ne, %1, %c0_i32_0 : i32
    scf.if %2 {
      %cst_21 = arith.constant 0.000000e+00 : f32
      %31 = vector.broadcast %cst_21 : f32 to vector<2x128xf32>
      %c0_22 = arith.constant 0 : index
      %c0_23 = arith.constant 0 : index
      %32 = vector.load %arg10[%c0_22, %c0_23] : memref<2x128xf32, #tpu.memory_space<vmem>>, vector<2x128xf32>
      tpu.vector_store %arg10[%c0_22, %c0_23], %31 {strides = array<i32>} : memref<2x128xf32, #tpu.memory_space<vmem>>, vector<2x128xf32>,
    } else {
    }
    %c0 = arith.constant 0 : index
    %c0_1 = arith.constant 0 : index
    %c0_2 = arith.constant 0 : index
    %3 = vector.load %arg2[%c0, %c0_1, %c0_2] : memref<2x8x64xf32, #tpu.memory_space<vmem>>, vector<2x8x64xf32>
    %4 = arith.truncf %3 : vector<2x8x64xf32> to vector<2x8x64xbf16>
    %5 = vector.shape_cast %4 : vector<2x8x64xbf16> to vector<16x64xbf16>
    %c0_3 = arith.constant 0 : index
    %c0_4 = arith.constant 0 : index
    %6 = vector.load %arg3[%c0_3, %c0_4] : memref<64x384xbf16, #tpu.memory_space<vmem>>, vector<64x384xbf16>
    %cst = arith.constant dense<0.000000e+00> : vector<16x384xf32>
    %7 = tpu.matmul %5, %6, %cst {dimension_numbers = #tpu.dot_dimension_numbers<[1], [0], [0], [1], [0, 0, 1, 1], [], []>} : vector<16x64xbf16>, vector<64x384xbf16>, vector<16x384xf32> -> vector<16x384xf32>
    %c0_5 = arith.constant 0 : index
    %c0_6 = arith.constant 0 : index
    %8 = vector.load %arg4[%c0_5, %c0_6] : memref<1x384xf32, #tpu.memory_space<vmem>>, vector<1x384xf32>
    %9 = vector.broadcast %8 : vector<1x384xf32> to vector<16x384xf32>
    %10 = arith.addf %7, %9 : vector<16x384xf32>
    %cst_7 = arith.constant 0.00999999977 : f32
    %11 = vector.broadcast %cst_7 : f32 to vector<16x384xf32>
    %12 = arith.mulf %11, %10 : vector<16x384xf32>
    %13 = arith.maximumf %10, %12 : vector<16x384xf32>
    %14 = arith.truncf %13 : vector<16x384xf32> to vector<16x384xbf16>
    %c0_8 = arith.constant 0 : index
    %c0_9 = arith.constant 0 : index
    %15 = vector.load %arg5[%c0_8, %c0_9] : memref<384x128xbf16, #tpu.memory_space<vmem>>, vector<384x128xbf16>
    %cst_10 = arith.constant dense<0.000000e+00> : vector<16x128xf32>
    %16 = tpu.matmul %14, %15, %cst_10 {dimension_numbers = #tpu.dot_dimension_numbers<[1], [0], [0], [1], [0, 0, 1, 1], [], []>} : vector<16x384xbf16>, vector<384x128xbf16>, vector<16x128xf32> -> vector<16x128xf32>
    %c0_11 = arith.constant 0 : index
    %c0_12 = arith.constant 0 : index
    %17 = vector.load %arg6[%c0_11, %c0_12] : memref<1x128xf32, #tpu.memory_space<vmem>>, vector<1x128xf32>
    %18 = vector.broadcast %17 : vector<1x128xf32> to vector<16x128xf32>
    %19 = arith.addf %16, %18 : vector<16x128xf32>
    %cst_13 = arith.constant 0.00999999977 : f32
    %20 = vector.broadcast %cst_13 : f32 to vector<16x128xf32>
    %21 = arith.mulf %20, %19 : vector<16x128xf32>
    %22 = arith.maximumf %19, %21 : vector<16x128xf32>
    %c0_14 = arith.constant 0 : index
    %c0_15 = arith.constant 0 : index
    %23 = vector.load %arg10[%c0_14, %c0_15] : memref<2x128xf32, #tpu.memory_space<vmem>>, vector<2x128xf32>
    %24 = vector.shape_cast %22 : vector<16x128xf32> to vector<2x8x128xf32>
    %cst_16 = arith.constant dense<0.000000e+00> : vector<2x128xf32>
    %25 = vector.multi_reduction <add>, %24, %cst_16 [1] : vector<2x8x128xf32> to vector<2x128xf32>
    %26 = arith.addf %23, %25 : vector<2x128xf32>
    %c0_17 = arith.constant 0 : index
    %c0_18 = arith.constant 0 : index
    %27 = vector.load %arg10[%c0_17, %c0_18] : memref<2x128xf32, #tpu.memory_space<vmem>>, vector<2x128xf32>
    tpu.vector_store %arg10[%c0_17, %c0_18], %26 {strides = array<i32>} : memref<2x128xf32, #tpu.memory_space<vmem>>, vector<2x128xf32>,
    %c0_i32_19 = arith.constant 0 : i32
    %28 = arith.cmpi eq, %arg1, %c0_i32_19 : i32
    %29 = arith.extui %28 : i1 to i32
    %c0_i32_20 = arith.constant 0 : i32
    %30 = arith.cmpi ne, %29, %c0_i32_20 : i32
    scf.if %30 {
      %c0_21 = arith.constant 0 : index
      %c0_22 = arith.constant 0 : index
      %31 = vector.load %arg10[%c0_21, %c0_22] : memref<2x128xf32, #tpu.memory_space<vmem>>, vector<2x128xf32>
      %cst_23 = arith.constant 1.250000e-01 : f32
      %32 = vector.broadcast %cst_23 : f32 to vector<2x128xf32>
      %33 = arith.mulf %31, %32 : vector<2x128xf32>
      %c0_24 = arith.constant 0 : index
      %c0_25 = arith.constant 0 : index
      %34 = vector.load %arg7[%c0_24, %c0_25] : memref<128x3xf32, #tpu.memory_space<vmem>>, vector<128x3xf32>
      %cst_26 = arith.constant dense<0.000000e+00> : vector<2x3xf32>
      %35 = tpu.matmul %33, %34, %cst_26 {dimension_numbers = #tpu.dot_dimension_numbers<[1], [0], [0], [1], [0, 0, 1, 1], [], []>} : vector<2x128xf32>, vector<128x3xf32>, vector<2x3xf32> -> vector<2x3xf32>
      %c0_27 = arith.constant 0 : index
      %c0_28 = arith.constant 0 : index
      %36 = vector.load %arg8[%c0_27, %c0_28] : memref<1x3xf32, #tpu.memory_space<vmem>>, vector<1x3xf32>
      %37 = vector.broadcast %36 : vector<1x3xf32> to vector<2x3xf32>
      %38 = arith.addf %35, %37 : vector<2x3xf32>
      %c0_29 = arith.constant 0 : index
      %c0_30 = arith.constant 0 : index
      %39 = vector.load %arg9[%c0_29, %c0_30] : memref<2x3xf32, #tpu.memory_space<vmem>>, vector<2x3xf32>
      tpu.vector_store %arg9[%c0_29, %c0_30], %38 {strides = array<i32>} : memref<2x3xf32, #tpu.memory_space<vmem>>, vector<2x3xf32>,
    } else {
    }
    return
  }
  func.func @transform_0(%arg0: i32, %arg1: i32) -> (i32, i32, i32) {
    %c0_i32 = arith.constant 0 : i32
    %c0_i32_0 = arith.constant 0 : i32
    return %arg0, %arg1, %c0_i32 : i32, i32, i32
  }
  func.func @transform_1(%arg0: i32, %arg1: i32) -> (i32, i32) {
    %c0_i32 = arith.constant 0 : i32
    %c0_i32_0 = arith.constant 0 : i32
    %c0_i32_1 = arith.constant 0 : i32
    return %c0_i32, %c0_i32_0 : i32, i32
  }
  func.func @transform_2(%arg0: i32, %arg1: i32) -> (i32, i32) {
    %c0_i32 = arith.constant 0 : i32
    %c0_i32_0 = arith.constant 0 : i32
    %c0_i32_1 = arith.constant 0 : i32
    return %c0_i32, %c0_i32_0 : i32, i32
  }
  func.func @transform_3(%arg0: i32, %arg1: i32) -> (i32, i32) {
    %c0_i32 = arith.constant 0 : i32
    %c0_i32_0 = arith.constant 0 : i32
    %c0_i32_1 = arith.constant 0 : i32
    return %c0_i32, %c0_i32_0 : i32, i32
  }
  func.func @transform_4(%arg0: i32, %arg1: i32) -> (i32, i32) {
    %c0_i32 = arith.constant 0 : i32
    %c0_i32_0 = arith.constant 0 : i32
    %c0_i32_1 = arith.constant 0 : i32
    return %c0_i32, %c0_i32_0 : i32, i32
  }
  func.func @transform_5(%arg0: i32, %arg1: i32) -> (i32, i32) {
    %c0_i32 = arith.constant 0 : i32
    %c0_i32_0 = arith.constant 0 : i32
    %c0_i32_1 = arith.constant 0 : i32
    return %c0_i32, %c0_i32_0 : i32, i32
  }
  func.func @transform_6(%arg0: i32, %arg1: i32) -> (i32, i32) {
    %c0_i32 = arith.constant 0 : i32
    %c0_i32_0 = arith.constant 0 : i32
    %c0_i32_1 = arith.constant 0 : i32
    return %c0_i32, %c0_i32_0 : i32, i32
  }
  func.func @transform_7(%arg0: i32, %arg1: i32) -> (i32, i32) {
    %c0_i32 = arith.constant 0 : i32
    %c0_i32_0 = arith.constant 0 : i32
    return %arg0, %c0_i32 : i32, i32
  }
}

</mosaic_0001>

<llo_original>
// kernel: tpu_custom_call.1
$region0: #{tpu_custom_call.1}
  #allocation0 [shape = 'u32[]', space=smem, size = 0x4, offset = 0x4, fixed_abs, tag = 'smem constant byte address 0x4 - core index']
  #allocation1 [shape = 'u32[144,128]{1,0:T(1,128)}', space=vmem, size = 0x12000, scoped, tag = 'internal scratch']
  #allocation2 [shape = 'f32[2,128]{1,0:T(2,128)}', space=vmem, size = 0x400, scoped, tag = 'scratch operand']
  %s0 = inlined_call_operand.vmem [shape: f32[2,8,64], index: 0, kind: input, shape index: {}]
  %s1 = inlined_call_operand.vmem [shape: bf16[64,384], index: 1, kind: input, shape index: {}]
  %s2 = inlined_call_operand.vmem [shape: f32[1,384], index: 2, kind: input, shape index: {}]
  %s3 = inlined_call_operand.hbm [shape: bf16[384,128], index: 3, kind: input, shape index: {}]
  %s4 = inlined_call_operand.vmem [shape: f32[1,128], index: 4, kind: input, shape index: {}]
  %s5 = inlined_call_operand.vmem [shape: f32[128,3], index: 5, kind: input, shape index: {}]
  %s6 = inlined_call_operand.vmem [shape: f32[1,3], index: 6, kind: input, shape index: {}]
  %s7 = inlined_call_operand.hbm [shape: f32[2,3], index: 7, kind: output, shape index: {}]
  %s8 = sld [smem:[#allocation0]]
  $region50: #{tpu_custom_call.1} parent=0
    _
  %s10 = ssub.s32 1, %s8
  %s11 = scalar_select 0, %s10, %s8
  $region1: #{tpu_custom_call.1} parent=0
    #allocation3 [shape = 'u8[98304]{0}', space=vmem, size = 0x18000, scoped, tag = 'input window, operand 3, single buffered']
    #allocation4 [shape = 's32[1]{0}', space=sflag, size = 0x4, scoped, tag = 'scoped memory for tpu_custom_call.1']
    #allocation5 [shape = 's32[1]{0}', space=sflag, size = 0x4, scoped, tag = 'scoped memory for tpu_custom_call.1']
    #allocation6 [shape = 'u8[1024]{0}', space=vmem, size = 0x400, scoped, tag = 'output window, operand 0, single buffered']
    %12 = vsyncpa [#allocation4], 0
    %13 = vsyncpa [#allocation5], 0
    // Predicated region
    $region2: #{tpu_custom_call.1} parent=1 // pred_check
      _
    $region3: #{tpu_custom_call.1} parent=1 // pred_check_branch
      %15 = sbr.rel (0) target = $region5
    $region4: #{tpu_custom_call.1} parent=1 // pred_region
      _
    $region5: #{tpu_custom_call.1} parent=1 // pred_fallthru
      _
    // Predicated region
    $region6: #{tpu_custom_call.1} parent=1 // pred_check
      _
    $region7: #{tpu_custom_call.1} parent=1 // pred_check_branch
      %17 = sbr.rel (0) target = $region9
    $region8: #{tpu_custom_call.1} parent=1 // pred_region
      _
    $region9: #{tpu_custom_call.1} parent=1 // pred_fallthru
      _
    // Predicated region
    $region10: #{tpu_custom_call.1} parent=1 // pred_check
      _
    $region11: #{tpu_custom_call.1} parent=1 // pred_check_branch
      %19 = sbr.rel (0) target = $region13
    $region12: #{tpu_custom_call.1} parent=1 // pred_region
      _
    $region13: #{tpu_custom_call.1} parent=1 // pred_fallthru
      _
    // Predicated region
    $region14: #{tpu_custom_call.1} parent=1 // pred_check
      _
    $region15: #{tpu_custom_call.1} parent=1 // pred_check_branch
      %21 = sbr.rel (0) target = $region17
    $region16: #{tpu_custom_call.1} parent=1 // pred_region
      %s23 = ssub.s32 3072, 3072
      %24 = vsyncadd [#allocation4], %s23
      %s25 = sshll.u32 [#allocation3], 4
      %s26 = int_to_ptr.vmem [resolvable:$true] %s25
      %31 = dma.hbm_to_vmem [thread:$0]  %s3, 3072, %s26, [#allocation4], 64, 64, 4
    $region17: #{tpu_custom_call.1} parent=1 // pred_fallthru
      _
    // Predicated region
    $region18: #{tpu_custom_call.1} parent=1 // pred_check
      _
    $region19: #{tpu_custom_call.1} parent=1 // pred_check_branch
      %33 = sbr.rel (0) target = $region21
    $region20: #{tpu_custom_call.1} parent=1 // pred_region
      _
    $region21: #{tpu_custom_call.1} parent=1 // pred_fallthru
      _
    // Predicated region
    $region22: #{tpu_custom_call.1} parent=1 // pred_check
      _
    $region23: #{tpu_custom_call.1} parent=1 // pred_check_branch
      %35 = sbr.rel (0) target = $region25
    $region24: #{tpu_custom_call.1} parent=1 // pred_region
      _
    $region25: #{tpu_custom_call.1} parent=1 // pred_fallthru
      _
    // Predicated region
    $region26: #{tpu_custom_call.1} parent=1 // pred_check
      _
    $region27: #{tpu_custom_call.1} parent=1 // pred_check_branch
      %37 = sbr.rel (0) target = $region29
    $region28: #{tpu_custom_call.1} parent=1 // pred_region
      _
    $region29: #{tpu_custom_call.1} parent=1 // pred_fallthru
      _
    // Predicated region
    $region30: #{tpu_custom_call.1} parent=1 // pred_check
      _
    $region31: #{tpu_custom_call.1} parent=1 // pred_check_branch
      %39 = sbr.rel (0) target = $region33
    $region32: #{tpu_custom_call.1} parent=1 // pred_region
      %40 = dma.done [#allocation4], 3072
    $region33: #{tpu_custom_call.1} parent=1 // pred_fallthru
      _
    %p42 = scmp.eq.s32.totalorder 0, 0
    // Predicated region
    $region34: #{tpu_custom_call.1} parent=1 // pred_check
      %p43 = pneg %p42
    $region35: #{tpu_custom_call.1} parent=1 // pred_check_branch
      %45 = sbr.rel (%p43) target = $region37
    $region36: #{tpu_custom_call.1} parent=1 // pred_region
      %46 = vst [vmem:[#allocation2] sm:$0x3] 0.0
    $region37: #{tpu_custom_call.1} parent=1 // pred_fallthru
      _
    %v47 = vld [vmem:[%s0] sm:$0xff]
    %v48 = vld [vmem:[%s0 + $0x8] sm:$0xff]
    %v49 = vpack.c.bf16 %v47, %v47
    %v50 = vpack.c.bf16 %v48, %v48
    %v51 = vld [vmem:[%s1] sm:$0xff]
    %v52 = vld [vmem:[%s1 + $0x8] sm:$0xf]
    %v53 = vld [vmem:[%s1 + $0xc] sm:$0xff]
    %v54 = vld [vmem:[%s1 + $0x14] sm:$0xf]
    %v55 = vld [vmem:[%s1 + $0x18] sm:$0xff]
    %v56 = vld [vmem:[%s1 + $0x20] sm:$0xf]
    %v57 = vld [vmem:[%s1 + $0x24] sm:$0xff]
    %v58 = vld [vmem:[%s1 + $0x2c] sm:$0xf]
    %v59 = vld [vmem:[%s1 + $0x30] sm:$0xff]
    %v60 = vld [vmem:[%s1 + $0x38] sm:$0xf]
    %v61 = vld [vmem:[%s1 + $0x3c] sm:$0xff]
    %v62 = vld [vmem:[%s1 + $0x44] sm:$0xf]
    %v63 = vld [vmem:[%s1 + $0x48] sm:$0xff]
    %v64 = vld [vmem:[%s1 + $0x50] sm:$0xf]
    %v65 = vld [vmem:[%s1 + $0x54] sm:$0xff]
    %v66 = vld [vmem:[%s1 + $0x5c] sm:$0xf]
    %v67 = vld [vmem:[%s2] sm:$0x7]
    %v69 = vlaneseq
    %v70 = vshrl.u32 %v69, 7
    %v71 = vsub.s32 0, %v70
    %v72 = vrot.slane %v67, %v71
    %v73 = vlaneseq
    %v74 = vshrl.u32 %v73, 7
    %v75 = vsub.s32 1, %v74
    %v76 = vrot.slane %v67, %v75
    %v77 = vlaneseq
    %v78 = vshrl.u32 %v77, 7
    %v79 = vsub.s32 2, %v78
    %v80 = vrot.slane %v67, %v79
    %v86 = vunpack.c.l.b16 %v49
    %v87 = vunpack.c.l.b16 %v50
    %v88 = vpack.c.b16 %v87, %v86
    %v105 = vunpack.c.l.b16 %v51
    %v106 = vunpack.c.h.b16 %v51
    %v107 = vunpack.c.l.b16 %v52
    %v108 = vunpack.c.l.b16 %v53
    %v109 = vunpack.c.h.b16 %v53
    %v110 = vunpack.c.l.b16 %v54
    %v111 = vunpack.c.l.b16 %v55
    %v112 = vunpack.c.h.b16 %v55
    %v113 = vunpack.c.l.b16 %v56
    %v114 = vunpack.c.l.b16 %v57
    %v115 = vunpack.c.h.b16 %v57
    %v116 = vunpack.c.l.b16 %v58
    %v117 = vunpack.c.l.b16 %v59
    %v118 = vunpack.c.h.b16 %v59
    %v119 = vunpack.c.l.b16 %v60
    %v120 = vunpack.c.l.b16 %v61
    %v121 = vunpack.c.h.b16 %v61
    %v122 = vunpack.c.l.b16 %v62
    %v123 = vunpack.c.l.b16 %v63
    %v124 = vunpack.c.h.b16 %v63
    %v125 = vunpack.c.l.b16 %v64
    %v126 = vunpack.c.l.b16 %v65
    %v127 = vunpack.c.h.b16 %v65
    %v128 = vunpack.c.l.b16 %v66
    %v129 = vpack.c.b16 %v108, %v105
    %v130 = vpack.c.b16 %v109, %v106
    %v131 = vpack.c.b16 %v110, %v107
    %v132 = vpack.c.b16 %v114, %v111
    %v133 = vpack.c.b16 %v115, %v112
    %v134 = vpack.c.b16 %v116, %v113
    %v135 = vpack.c.b16 %v120, %v117
    %v136 = vpack.c.b16 %v121, %v118
    %v137 = vpack.c.b16 %v122, %v119
    %v138 = vpack.c.b16 %v126, %v123
    %v139 = vpack.c.b16 %v127, %v124
    %v140 = vpack.c.b16 %v128, %v125
    %vm153 = vcmask 523264
    %v155 = vsel %vm153, %v88, 0
    %157 = vmatprep.subr.bf16.mxu0 %v130
    %158 = vmatpush1.bf16.msra.mxu0 %v129
    %159 = vmatprep.subr.bf16.mxu0 %v133
    %160 = vmatpush1.bf16.msra.mxu0 %v132
    %161 = vmatprep.subr.bf16.mxu0 %v136
    %162 = vmatpush1.bf16.msra.mxu0 %v135
    %163 = vmatprep.subr.bf16.mxu0 %v139
    %164 = vmatpush1.bf16.msra.mxu0 %v138
    %165 = vmatprep.subr.bf16.mxu0 0
    %166 = vmatpush1.bf16.msra.mxu0 0
    %167 = vmatprep.subr.bf16.mxu0 0
    %168 = vmatpush1.bf16.msra.mxu0 0
    %169 = vmatprep.subr.bf16.mxu0 0
    %170 = vmatpush1.bf16.msra.mxu0 0
    %171 = vmatprep.subr.bf16.mxu0 0
    %172 = vmatpush1.bf16.msra.mxu0 0
    %173 = vmatprep.subr.bf16.mxu0 0
    %174 = vmatpush1.bf16.msra.mxu0 0
    %175 = vmatprep.subr.bf16.mxu0 0
    %176 = vmatpush1.bf16.msra.mxu0 0
    %177 = vmatprep.subr.bf16.mxu0 0
    %178 = vmatpush1.bf16.msra.mxu0 0
    %179 = vmatprep.subr.bf16.mxu0 0
    %180 = vmatpush1.bf16.msra.mxu0 0
    %181 = vmatprep.subr.bf16.mxu0 0
    %182 = vmatpush1.bf16.msra.mxu0 0
    %183 = vmatprep.subr.bf16.mxu0 0
    %184 = vmatpush1.bf16.msra.mxu0 0
    %185 = vmatprep.subr.bf16.mxu0 0
    %186 = vmatpush1.bf16.msra.mxu0 0
    %187 = vmatprep.subr.bf16.mxu0 0
    %188 = vmatpush1.bf16.msra.mxu0 0
    %189 = vmatprep.mubr.bf16.mxu0 0
    %190 = vmatmul.mubr.bf16.gmra.mrb[0].mxu0 %v155
    %v191 = vpop.f32.mrb[0].mxu0
    %v192 = vadd.f32 %v72, %v191
    %v193 = vpop.f32.mrb[0].mxu0
    %v194 = vadd.f32 %v76, %v193
    %v195 = vpop.f32.mrb[0].mxu0
    %v196 = vadd.f32 %v72, %v195
    %v197 = vpop.f32.mrb[0].mxu0
    %v198 = vadd.f32 %v76, %v197
    %199 = vdwg.mxu0
    %200 = vmatprep.subr.bf16.mxu0 0
    %201 = vmatpush1.bf16.msra.mxu0 %v131
    %202 = vmatprep.subr.bf16.mxu0 0
    %203 = vmatpush1.bf16.msra.mxu0 %v134
    %204 = vmatprep.subr.bf16.mxu0 0
    %205 = vmatpush1.bf16.msra.mxu0 %v137
    %206 = vmatprep.subr.bf16.mxu0 0
    %207 = vmatpush1.bf16.msra.mxu0 %v140
    %208 = vmatprep.subr.bf16.mxu0 0
    %209 = vmatpush1.bf16.msra.mxu0 0
    %210 = vmatprep.subr.bf16.mxu0 0
    %211 = vmatpush1.bf16.msra.mxu0 0
    %212 = vmatprep.subr.bf16.mxu0 0
    %213 = vmatpush1.bf16.msra.mxu0 0
    %214 = vmatprep.subr.bf16.mxu0 0
    %215 = vmatpush1.bf16.msra.mxu0 0
    %216 = vmatprep.subr.bf16.mxu0 0
    %217 = vmatpush1.bf16.msra.mxu0 0
    %218 = vmatprep.subr.bf16.mxu0 0
    %219 = vmatpush1.bf16.msra.mxu0 0
    %220 = vmatprep.subr.bf16.mxu0 0
    %221 = vmatpush1.bf16.msra.mxu0 0
    %222 = vmatprep.subr.bf16.mxu0 0
    %223 = vmatpush1.bf16.msra.mxu0 0
    %224 = vmatprep.subr.bf16.mxu0 0
    %225 = vmatpush1.bf16.msra.mxu0 0
    %226 = vmatprep.subr.bf16.mxu0 0
    %227 = vmatpush1.bf16.msra.mxu0 0
    %228 = vmatprep.subr.bf16.mxu0 0
    %229 = vmatpush1.bf16.msra.mxu0 0
    %230 = vmatprep.subr.bf16.mxu0 0
    %231 = vmatpush1.bf16.msra.mxu0 0
    %232 = vmatprep.mubr.bf16.mxu0 0
    %233 = vmatmul.mubr.bf16.gmra.mrb[0].mxu0 %v155
    %v234 = vpop.f32.mrb[0].mxu0
    %v235 = vadd.f32 %v80, %v234
    %v236 = vpop.f32.mrb[0].mxu0
    %v237 = vpop.f32.mrb[0].mxu0
    %v238 = vadd.f32 %v80, %v237
    %v239 = vpop.f32.mrb[0].mxu0
    %240 = vdwg.mxu0
    %v241 = vmul.f32 %v192, 0.01
    %v242 = vmul.f32 %v194, 0.01
    %v243 = vmul.f32 %v235, 0.01
    %v244 = vmul.f32 %v196, 0.01
    %v245 = vmul.f32 %v198, 0.01
    %v246 = vmul.f32 %v238, 0.01
    %v247 = vmax.f32 %v192, %v241
    %v248 = vmax.f32 %v194, %v242
    %v249 = vmax.f32 %v235, %v243
    %v250 = vmax.f32 %v196, %v244
    %v251 = vmax.f32 %v198, %v245
    %v252 = vmax.f32 %v238, %v246
    %v253 = vpack.c.bf16 %v250, %v247
    %v254 = vpack.c.bf16 %v251, %v248
    %v255 = vpack.c.bf16 %v252, %v249
    %v256 = vld [vmem:[#allocation3] sm:$0xf]
    %v257 = vld [vmem:[#allocation3 + $0x4] sm:$0xf]
    %v258 = vld [vmem:[#allocation3 + $0x8] sm:$0xf]
    %v259 = vld [vmem:[#allocation3 + $0xc] sm:$0xf]
    %v260 = vld [vmem:[#allocation3 + $0x10] sm:$0xf]
    %v261 = vld [vmem:[#allocation3 + $0x14] sm:$0xf]
    %v262 = vld [vmem:[#allocation3 + $0x18] sm:$0xf]
    %v263 = vld [vmem:[#allocation3 + $0x1c] sm:$0xf]
    %v264 = vld [vmem:[#allocation3 + $0x20] sm:$0xf]
    %v265 = vld [vmem:[#allocation3 + $0x24] sm:$0xf]
    %v266 = vld [vmem:[#allocation3 + $0x28] sm:$0xf]
    %v267 = vld [vmem:[#allocation3 + $0x2c] sm:$0xf]
    %v268 = vld [vmem:[#allocation3 + $0x30] sm:$0xf]
    %v269 = vld [vmem:[#allocation3 + $0x34] sm:$0xf]
    %v270 = vld [vmem:[#allocation3 + $0x38] sm:$0xf]
    %v271 = vld [vmem:[#allocation3 + $0x3c] sm:$0xf]
    %v272 = vld [vmem:[#allocation3 + $0x40] sm:$0xf]
    %v273 = vld [vmem:[#allocation3 + $0x44] sm:$0xf]
    %v274 = vld [vmem:[#allocation3 + $0x48] sm:$0xf]
    %v275 = vld [vmem:[#allocation3 + $0x4c] sm:$0xf]
    %v276 = vld [vmem:[#allocation3 + $0x50] sm:$0xf]
    %v277 = vld [vmem:[#allocation3 + $0x54] sm:$0xf]
    %v278 = vld [vmem:[#allocation3 + $0x58] sm:$0xf]
    %v279 = vld [vmem:[#allocation3 + $0x5c] sm:$0xf]
    %v280 = vld [vmem:[#allocation3 + $0x60] sm:$0xf]
    %v281 = vld [vmem:[#allocation3 + $0x64] sm:$0xf]
    %v282 = vld [vmem:[#allocation3 + $0x68] sm:$0xf]
    %v283 = vld [vmem:[#allocation3 + $0x6c] sm:$0xf]
    %v284 = vld [vmem:[#allocation3 + $0x70] sm:$0xf]
    %v285 = vld [vmem:[#allocation3 + $0x74] sm:$0xf]
    %v286 = vld [vmem:[#allocation3 + $0x78] sm:$0xf]
    %v287 = vld [vmem:[#allocation3 + $0x7c] sm:$0xf]
    %v288 = vld [vmem:[#allocation3 + $0x80] sm:$0xf]
    %v289 = vld [vmem:[#allocation3 + $0x84] sm:$0xf]
    %v290 = vld [vmem:[#allocation3 + $0x88] sm:$0xf]
    %v291 = vld [vmem:[#allocation3 + $0x8c] sm:$0xf]
    %v292 = vld [vmem:[#allocation3 + $0x90] sm:$0xf]
    %v293 = vld [vmem:[#allocation3 + $0x94] sm:$0xf]
    %v294 = vld [vmem:[#allocation3 + $0x98] sm:$0xf]
    %v295 = vld [vmem:[#allocation3 + $0x9c] sm:$0xf]
    %v296 = vld [vmem:[#allocation3 + $0xa0] sm:$0xf]
    %v297 = vld [vmem:[#allocation3 + $0xa4] sm:$0xf]
    %v298 = vld [vmem:[#allocation3 + $0xa8] sm:$0xf]
    %v299 = vld [vmem:[#allocation3 + $0xac] sm:$0xf]
    %v300 = vld [vmem:[#allocation3 + $0xb0] sm:$0xf]
    %v301 = vld [vmem:[#allocation3 + $0xb4] sm:$0xf]
    %v302 = vld [vmem:[#allocation3 + $0xb8] sm:$0xf]
    %v303 = vld [vmem:[#allocation3 + $0xbc] sm:$0xf]
    %v304 = vld [vmem:[%s4] sm:$0x1]
    %v306 = vlaneseq
    %v307 = vshrl.u32 %v306, 7
    %v308 = vsub.s32 0, %v307
    %v309 = vrot.slane %v304, %v308
    %v359 = vunpack.c.l.b16 %v256
    %v360 = vunpack.c.l.b16 %v257
    %v361 = vunpack.c.l.b16 %v258
    %v362 = vunpack.c.l.b16 %v259
    %v363 = vunpack.c.l.b16 %v260
    %v364 = vunpack.c.l.b16 %v261
    %v365 = vunpack.c.l.b16 %v262
    %v366 = vunpack.c.l.b16 %v263
    %v367 = vunpack.c.l.b16 %v264
    %v368 = vunpack.c.l.b16 %v265
    %v369 = vunpack.c.l.b16 %v266
    %v370 = vunpack.c.l.b16 %v267
    %v371 = vunpack.c.l.b16 %v268
    %v372 = vunpack.c.l.b16 %v269
    %v373 = vunpack.c.l.b16 %v270
    %v374 = vunpack.c.l.b16 %v271
    %v375 = vunpack.c.l.b16 %v272
    %v376 = vunpack.c.l.b16 %v273
    %v377 = vunpack.c.l.b16 %v274
    %v378 = vunpack.c.l.b16 %v275
    %v379 = vunpack.c.l.b16 %v276
    %v380 = vunpack.c.l.b16 %v277
    %v381 = vunpack.c.l.b16 %v278
    %v382 = vunpack.c.l.b16 %v279
    %v383 = vunpack.c.l.b16 %v280
    %v384 = vunpack.c.l.b16 %v281
    %v385 = vunpack.c.l.b16 %v282
    %v386 = vunpack.c.l.b16 %v283
    %v387 = vunpack.c.l.b16 %v284
    %v388 = vunpack.c.l.b16 %v285
    %v389 = vunpack.c.l.b16 %v286
    %v390 = vunpack.c.l.b16 %v287
    %v391 = vunpack.c.l.b16 %v288
    %v392 = vunpack.c.l.b16 %v289
    %v393 = vunpack.c.l.b16 %v290
    %v394 = vunpack.c.l.b16 %v291
    %v395 = vunpack.c.l.b16 %v292
    %v396 = vunpack.c.l.b16 %v293
    %v397 = vunpack.c.l.b16 %v294
    %v398 = vunpack.c.l.b16 %v295
    %v399 = vunpack.c.l.b16 %v296
    %v400 = vunpack.c.l.b16 %v297
    %v401 = vunpack.c.l.b16 %v298
    %v402 = vunpack.c.l.b16 %v299
    %v403 = vunpack.c.l.b16 %v300
    %v404 = vunpack.c.l.b16 %v301
    %v405 = vunpack.c.l.b16 %v302
    %v406 = vunpack.c.l.b16 %v303
    %v407 = vpack.c.b16 %v360, %v359
    %v408 = vpack.c.b16 %v362, %v361
    %v409 = vpack.c.b16 %v364, %v363
    %v410 = vpack.c.b16 %v366, %v365
    %v411 = vpack.c.b16 %v368, %v367
    %v412 = vpack.c.b16 %v370, %v369
    %v413 = vpack.c.b16 %v372, %v371
    %v414 = vpack.c.b16 %v374, %v373
    %v415 = vpack.c.b16 %v376, %v375
    %v416 = vpack.c.b16 %v378, %v377
    %v417 = vpack.c.b16 %v380, %v379
    %v418 = vpack.c.b16 %v382, %v381
    %v419 = vpack.c.b16 %v384, %v383
    %v420 = vpack.c.b16 %v386, %v385
    %v421 = vpack.c.b16 %v388, %v387
    %v422 = vpack.c.b16 %v390, %v389
    %v423 = vpack.c.b16 %v392, %v391
    %v424 = vpack.c.b16 %v394, %v393
    %v425 = vpack.c.b16 %v396, %v395
    %v426 = vpack.c.b16 %v398, %v397
    %v427 = vpack.c.b16 %v400, %v399
    %v428 = vpack.c.b16 %v402, %v401
    %v429 = vpack.c.b16 %v404, %v403
    %v430 = vpack.c.b16 %v406, %v405
    %455 = vmatprep.subr.bf16.mxu0 0
    %456 = vmatpush1.bf16.msra.mxu0 %v407
    %457 = vmatprep.subr.bf16.mxu0 0
    %458 = vmatpush1.bf16.msra.mxu0 %v408
    %459 = vmatprep.subr.bf16.mxu0 0
    %460 = vmatpush1.bf16.msra.mxu0 %v409
    %461 = vmatprep.subr.bf16.mxu0 0
    %462 = vmatpush1.bf16.msra.mxu0 %v410
    %463 = vmatprep.subr.bf16.mxu0 0
    %464 = vmatpush1.bf16.msra.mxu0 %v411
    %465 = vmatprep.subr.bf16.mxu0 0
    %466 = vmatpush1.bf16.msra.mxu0 %v412
    %467 = vmatprep.subr.bf16.mxu0 0
    %468 = vmatpush1.bf16.msra.mxu0 %v413
    %469 = vmatprep.subr.bf16.mxu0 0
    %470 = vmatpush1.bf16.msra.mxu0 %v414
    %471 = vmatprep.subr.bf16.mxu0 0
    %472 = vmatpush1.bf16.msra.mxu0 %v415
    %473 = vmatprep.subr.bf16.mxu0 0
    %474 = vmatpush1.bf16.msra.mxu0 %v416
    %475 = vmatprep.subr.bf16.mxu0 0
    %476 = vmatpush1.bf16.msra.mxu0 %v417
    %477 = vmatprep.subr.bf16.mxu0 0
    %478 = vmatpush1.bf16.msra.mxu0 %v418
    %479 = vmatprep.subr.bf16.mxu0 0
    %480 = vmatpush1.bf16.msra.mxu0 %v419
    %481 = vmatprep.subr.bf16.mxu0 0
    %482 = vmatpush1.bf16.msra.mxu0 %v420
    %483 = vmatprep.subr.bf16.mxu0 0
    %484 = vmatpush1.bf16.msra.mxu0 %v421
    %485 = vmatprep.subr.bf16.mxu0 0
    %486 = vmatpush1.bf16.msra.mxu0 %v422
    %487 = vmatprep.mubr.bf16.mxu0 %v254
    %488 = vmatmul.mubr.bf16.gmra.mrb[0].mxu0 %v253
    %v489 = vpop.f32.mrb[0].mxu0
    %v490 = vadd.f32 %v309, %v489
    %v491 = vpop.f32.mrb[0].mxu0
    %v492 = vpop.f32.mrb[0].mxu0
    %v493 = vadd.f32 %v309, %v492
    %v494 = vpop.f32.mrb[0].mxu0
    %495 = vdwg.mxu0
    %496 = vmatprep.subr.bf16.mxu0 0
    %497 = vmatpush1.bf16.msra.mxu0 %v423
    %498 = vmatprep.subr.bf16.mxu0 0
    %499 = vmatpush1.bf16.msra.mxu0 %v424
    %500 = vmatprep.subr.bf16.mxu0 0
    %501 = vmatpush1.bf16.msra.mxu0 %v425
    %502 = vmatprep.subr.bf16.mxu0 0
    %503 = vmatpush1.bf16.msra.mxu0 %v426
    %504 = vmatprep.subr.bf16.mxu0 0
    %505 = vmatpush1.bf16.msra.mxu0 %v427
    %506 = vmatprep.subr.bf16.mxu0 0
    %507 = vmatpush1.bf16.msra.mxu0 %v428
    %508 = vmatprep.subr.bf16.mxu0 0
    %509 = vmatpush1.bf16.msra.mxu0 %v429
    %510 = vmatprep.subr.bf16.mxu0 0
    %511 = vmatpush1.bf16.msra.mxu0 %v430
    %512 = vmatprep.subr.bf16.mxu0 0
    %513 = vmatpush1.bf16.msra.mxu0 0
    %514 = vmatprep.subr.bf16.mxu0 0
    %515 = vmatpush1.bf16.msra.mxu0 0
    %516 = vmatprep.subr.bf16.mxu0 0
    %517 = vmatpush1.bf16.msra.mxu0 0
    %518 = vmatprep.subr.bf16.mxu0 0
    %519 = vmatpush1.bf16.msra.mxu0 0
    %520 = vmatprep.subr.bf16.mxu0 0
    %521 = vmatpush1.bf16.msra.mxu0 0
    %522 = vmatprep.subr.bf16.mxu0 0
    %523 = vmatpush1.bf16.msra.mxu0 0
    %524 = vmatprep.subr.bf16.mxu0 0
    %525 = vmatpush1.bf16.msra.mxu0 0
    %526 = vmatprep.subr.bf16.mxu0 0
    %527 = vmatpush1.bf16.msra.mxu0 0
    %528 = vmatprep.mubr.bf16.mxu0 0
    %529 = vmatmul.mubr.bf16.gmra.mrb[0].mxu0 %v255
    %v530 = vpop.f32.mrb[0].mxu0
    %v531 = vadd.f32 %v490, %v530
    %v532 = vpop.f32.mrb[0].mxu0
    %v533 = vpop.f32.mrb[0].mxu0
    %v534 = vadd.f32 %v493, %v533
    %v535 = vpop.f32.mrb[0].mxu0
    %536 = vdwg.mxu0
    %v537 = vmul.f32 %v531, 0.01
    %v538 = vmul.f32 %v534, 0.01
    %v539 = vmax.f32 %v531, %v537
    %v540 = vmax.f32 %v534, %v538
    %v541 = vld [vmem:[#allocation2] sm:$0x3]
    %v542 = vrot.slane %v539, 4
    %v543 = vadd.f32 %v539, %v542
    %v544 = vrot.slane %v543, 2
    %v545 = vadd.f32 %v543, %v544
    %v546 = vrot.slane %v545, 1
    %v547 = vadd.f32 %v545, %v546
    %v548 = vrot.slane %v540, 4
    %v549 = vadd.f32 %v540, %v548
    %v550 = vrot.slane %v549, 2
    %v551 = vadd.f32 %v549, %v550
    %v552 = vrot.slane %v551, 1
    %v553 = vadd.f32 %v551, %v552
    %vm556 = vcmask 1041409
    %v557 = vsel %vm556, %v553, %v547
    %v559 = vadd.f32 %v541, %v557
    %560 = vst [vmem:[#allocation2] sm:$0x3] %v559
    // Predicated region
    $region38: #{tpu_custom_call.1} parent=1 // pred_check
      %p561 = pneg %p42
    $region39: #{tpu_custom_call.1} parent=1 // pred_check_branch
      %563 = sbr.rel (%p561) target = $region41
    $region40: #{tpu_custom_call.1} parent=1 // pred_region
      %v564 = vld [vmem:[#allocation2] sm:$0x3]
      %v565 = vmul.f32 %v564, 0.125
      %v566 = vld [vmem:[%s5] sm:$0xff]
      %v567 = vld [vmem:[%s5 + $0x8] sm:$0xff]
      %v568 = vld [vmem:[%s5 + $0x10] sm:$0xff]
      %v569 = vld [vmem:[%s5 + $0x18] sm:$0xff]
      %v570 = vld [vmem:[%s5 + $0x20] sm:$0xff]
      %v571 = vld [vmem:[%s5 + $0x28] sm:$0xff]
      %v572 = vld [vmem:[%s5 + $0x30] sm:$0xff]
      %v573 = vld [vmem:[%s5 + $0x38] sm:$0xff]
      %v574 = vld [vmem:[%s5 + $0x40] sm:$0xff]
      %v575 = vld [vmem:[%s5 + $0x48] sm:$0xff]
      %v576 = vld [vmem:[%s5 + $0x50] sm:$0xff]
      %v577 = vld [vmem:[%s5 + $0x58] sm:$0xff]
      %v578 = vld [vmem:[%s5 + $0x60] sm:$0xff]
      %v579 = vld [vmem:[%s5 + $0x68] sm:$0xff]
      %v580 = vld [vmem:[%s5 + $0x70] sm:$0xff]
      %v581 = vld [vmem:[%s5 + $0x78] sm:$0xff]
      %v582 = vld [vmem:[%s6] sm:$0x1]
      %v584 = vlaneseq
      %v585 = vshrl.u32 %v584, 7
      %v586 = vsub.s32 0, %v585
      %v587 = vrot.slane %v582, %v586
      %589 = vmatprep.subr.mxu0 0.0
      %590 = vmatpush1.msra.mxu0 %v566
      %591 = vmatprep.subr.mxu0 0.0
      %592 = vmatpush1.msra.mxu0 %v567
      %593 = vmatprep.subr.mxu0 0.0
      %594 = vmatpush1.msra.mxu0 %v568
      %595 = vmatprep.subr.mxu0 0.0
      %596 = vmatpush1.msra.mxu0 %v569
      %597 = vmatprep.subr.mxu0 0.0
      %598 = vmatpush1.msra.mxu0 %v570
      %599 = vmatprep.subr.mxu0 0.0
      %600 = vmatpush1.msra.mxu0 %v571
      %601 = vmatprep.subr.mxu0 0.0
      %602 = vmatpush1.msra.mxu0 %v572
      %603 = vmatprep.subr.mxu0 0.0
      %604 = vmatpush1.msra.mxu0 %v573
      %605 = vmatprep.subr.mxu0 0.0
      %606 = vmatpush1.msra.mxu0 %v574
      %607 = vmatprep.subr.mxu0 0.0
      %608 = vmatpush1.msra.mxu0 %v575
      %609 = vmatprep.subr.mxu0 0.0
      %610 = vmatpush1.msra.mxu0 %v576
      %611 = vmatprep.subr.mxu0 0.0
      %612 = vmatpush1.msra.mxu0 %v577
      %613 = vmatprep.subr.mxu0 0.0
      %614 = vmatpush1.msra.mxu0 %v578
      %615 = vmatprep.subr.mxu0 0.0
      %616 = vmatpush1.msra.mxu0 %v579
      %617 = vmatprep.subr.mxu0 0.0
      %618 = vmatpush1.msra.mxu0 %v580
      %619 = vmatprep.subr.mxu0 0.0
      %620 = vmatpush1.msra.mxu0 %v581
      %621 = vmatprep.subr.mxu0 0.0
      %622 = vmatpush1.msra.mxu0 0.0
      %623 = vmatprep.subr.mxu0 0.0
      %624 = vmatpush1.msra.mxu0 0.0
      %625 = vmatprep.subr.mxu0 0.0
      %626 = vmatpush1.msra.mxu0 0.0
      %627 = vmatprep.subr.mxu0 0.0
      %628 = vmatpush1.msra.mxu0 0.0
      %629 = vmatprep.subr.mxu0 0.0
      %630 = vmatpush1.msra.mxu0 0.0
      %631 = vmatprep.subr.mxu0 0.0
      %632 = vmatpush1.msra.mxu0 0.0
      %633 = vmatprep.subr.mxu0 0.0
      %634 = vmatpush1.msra.mxu0 0.0
      %635 = vmatprep.subr.mxu0 0.0
      %636 = vmatpush1.msra.mxu0 0.0
      %637 = vmatprep.subr.mxu0 0.0
      %638 = vmatpush1.msra.mxu0 0.0
      %639 = vmatprep.subr.mxu0 0.0
      %640 = vmatpush1.msra.mxu0 0.0
      %641 = vmatprep.subr.mxu0 0.0
      %642 = vmatpush1.msra.mxu0 0.0
      %643 = vmatprep.subr.mxu0 0.0
      %644 = vmatpush1.msra.mxu0 0.0
      %645 = vmatprep.subr.mxu0 0.0
      %646 = vmatpush1.msra.mxu0 0.0
      %647 = vmatprep.subr.mxu0 0.0
      %648 = vmatpush1.msra.mxu0 0.0
      %649 = vmatprep.subr.mxu0 0.0
      %650 = vmatpush1.msra.mxu0 0.0
      %651 = vmatprep.subr.mxu0 0.0
      %652 = vmatpush1.msra.mxu0 0.0
      %653 = vmatprep.mubr.f32.mxu0 0.0
      %654 = vmatmul.mubr.f32.gmra.mrb[0].mxu0 %v565
      %v655 = vpop.f32.mrb[0].mxu0
      %v656 = vadd.f32 %v587, %v655
      %v657 = vpop.f32.mrb[0].mxu0
      %658 = vdwg.mxu0
      %vm659 = vcmask 17408
      %660 = vst.msk [vmem:[#allocation6] sm:$0x3] %vm659, %v656
    $region41: #{tpu_custom_call.1} parent=1 // pred_fallthru
      _
    // Predicated region
    $region42: #{tpu_custom_call.1} parent=1 // pred_check
      _
    $region43: #{tpu_custom_call.1} parent=1 // pred_check_branch
      %662 = sbr.rel (0) target = $region45
    $region44: #{tpu_custom_call.1} parent=1 // pred_region
      %s664 = ssub.s32 32, 32
      %665 = vsyncadd [#allocation5], %s664
      %s667 = sshll.u32 [#allocation6], 4
      %s668 = int_to_ptr.vmem [resolvable:$true] %s667
      %670 = dma.vmem_to_hbm [thread:$0]  %s668, 32, %s7, [#allocation5]
    $region45: #{tpu_custom_call.1} parent=1 // pred_fallthru
      _
    // Predicated region
    $region46: #{tpu_custom_call.1} parent=1 // pred_check
      _
    $region47: #{tpu_custom_call.1} parent=1 // pred_check_branch
      %672 = sbr.rel (0) target = $region49
    $region48: #{tpu_custom_call.1} parent=1 // pred_region
      %673 = dma.done [#allocation5], 32
    $region49: #{tpu_custom_call.1} parent=1 // pred_fallthru
      _
    %674 = vsyncpa [#allocation4], 1
    %675 = vsyncpa [#allocation5], 1

</llo_original>
